<compile_context>
chip_gen: v7x
topology: tpu7x:2x2x1
jax: 0.10.0
libtpu: 0.0.40
codegen_flags: <defaults>
</compile_context>

<pallas_src>
import functools

import jax
import jax.numpy as jnp
from jax.experimental import pallas as pl
from jax.experimental.pallas import tpu as pltpu

INPUT_SIZE = 5                  # seq_length in the original script
HIDDEN_SIZES = [50, 30, 10]
OUTPUT_SIZE = 1
LAYER_SIZES = [INPUT_SIZE] + HIDDEN_SIZES + [OUTPUT_SIZE]
NUM_LAYERS = len(LAYER_SIZES) - 1      # 4 linear layers
PAD = 128                              # lane-dense padded feature width for hidden/out
IN_PAD = 8                             # input padded only to one sublane group


def _round_up(x, m):
    return ((x + m - 1) // m) * m


def lnn_kernel(x_ref, w_ref, b_ref, o_ref):
    """Fused MLP forward on zero-padded activations.

    x_ref: (bt, IN_PAD)               input rows, cols >= INPUT_SIZE are zero
    w_ref: (NUM_LAYERS, PAD, PAD)     zero-padded [in, out] weights (single slab)
    b_ref: (NUM_LAYERS, 1, PAD)       zero-padded biases (single slab)
    o_ref: (bt, PAD)                  column 0 holds the real output
    """
    # Layer 0: contract only over the (sublane-aligned) 8-wide padded input.
    # Padded rows/cols of the weight slab are zero, so the padded matmul equals the
    # un-padded one on real columns; padded columns stay exactly 0 (bias pad 0, tanh(0)=0).
    h = jnp.dot(x_ref[...], w_ref[0, :IN_PAD, :],
                preferred_element_type=jnp.float32) + b_ref[0]
    h = jnp.tanh(h)
    for layer in range(1, NUM_LAYERS):
        h = jnp.dot(h, w_ref[layer], preferred_element_type=jnp.float32) + b_ref[layer]
        if layer < NUM_LAYERS - 1:
            h = jnp.tanh(h)
    o_ref[...] = h


def init_params(key):
    """Deterministic stand-in for torch.randn parameter init.

    Returns list of (weight[out, in], bias[out]) -- PyTorch convention.
    """
    params = []
    for i in range(NUM_LAYERS):
        key, kw, kb = jax.random.split(key, 3)
        w = jax.random.normal(kw, (LAYER_SIZES[i + 1], LAYER_SIZES[i]), dtype=jnp.float32)
        b = jax.random.normal(kb, (LAYER_SIZES[i + 1],), dtype=jnp.float32)
        params.append((w, b))
    return params


def pack_params(params):
    """One-time packing: transpose to [in, out], zero-pad to 128x128, stack into slabs."""
    w_slab = jnp.zeros((NUM_LAYERS, PAD, PAD), jnp.float32)
    b_slab = jnp.zeros((NUM_LAYERS, 1, PAD), jnp.float32)
    for l, (w, b) in enumerate(params):
        out_d, in_d = w.shape
        w_slab = w_slab.at[l, :in_d, :out_d].set(jnp.asarray(w, jnp.float32).T)
        b_slab = b_slab.at[l, 0, :out_d].set(jnp.asarray(b, jnp.float32))
    return w_slab, b_slab


def _forward_padded(x_pad, w_slab, b_slab, *, batch_tile):
    Bp = x_pad.shape[0]
    return pl.pallas_call(
        lnn_kernel,
        out_shape=jax.ShapeDtypeStruct((Bp, PAD), jnp.float32),
        grid_spec=pl.GridSpec(
            grid=(Bp // batch_tile,),
            in_specs=[
                pl.BlockSpec((batch_tile, IN_PAD), lambda i: (i, 0)),
                # grid-invariant weight/bias slabs: full-array blocks, fetched once
                pl.BlockSpec((NUM_LAYERS, PAD, PAD), lambda i: (0, 0, 0)),
                pl.BlockSpec((NUM_LAYERS, 1, PAD), lambda i: (0, 0, 0)),
            ],
            out_specs=pl.BlockSpec((batch_tile, PAD), lambda i: (i, 0)),
        ),
        compiler_params=pltpu.CompilerParams(
            dimension_semantics=("parallel",)),
    )(x_pad, w_slab, b_slab)


@functools.partial(jax.jit, static_argnames=("batch_tile",))
def _forward_jit(x, w_slab, b_slab, *, batch_tile):
    B, F = x.shape
    Bp = _round_up(B, batch_tile)
    # Pad batch to a multiple of batch_tile and features to one 8-wide sublane group.
    x_pad = jnp.pad(x.astype(jnp.float32), ((0, Bp - B), (0, IN_PAD - F)))
    y_pad = _forward_padded(x_pad, w_slab, b_slab, batch_tile=batch_tile)
    # Real output is column 0 of the lane-dense result; padded rows are dropped here.
    return y_pad[:B, :OUTPUT_SIZE]


def liquid_nn_forward(x, w_slab, b_slab, *, max_batch_tile=256):
    """LiquidNeuralNetwork forward. x: [B, INPUT_SIZE] (any B)."""
    B = x.shape[0]
    batch_tile = min(max_batch_tile, _round_up(B, 8))  # don't over-pad tiny batches
    return _forward_jit(x, w_slab, b_slab, batch_tile=batch_tile)


def reference_forward(x, params):
    """Pure-JAX reference mirroring the PyTorch forward."""
    h = x
    n = len(params)
    for li, (w, b) in enumerate(params):
        h = h @ w.T + b
        if li < n - 1:
            h = jnp.tanh(h)
    return h


if __name__ == "__main__":
    key = jax.random.PRNGKey(0)
    key, kx = jax.random.split(key)

    # 500 rows -> padded to 512 -> 2 "parallel" grid steps of 256 MXU-height rows each
    # (keeps both v7x TCs busy) and exercises the ragged-batch padding path.
    B = 500
    x = jax.random.normal(kx, (B, INPUT_SIZE), dtype=jnp.float32)

    params = init_params(key)
    w_slab, b_slab = pack_params(params)      # one-time packing, outside the call path

    out = liquid_nn_forward(x, w_slab, b_slab)
    out = jax.block_until_ready(out)

    ref = reference_forward(x, params)
    assert out.shape == (B, OUTPUT_SIZE)
    assert jnp.allclose(out, ref, atol=1e-4, rtol=1e-4)

    print("KERNEL_OK")
</pallas_src>

<mosaic_0001>
module attributes {stable_mosaic.version = 11 : i64} {
  func.func @lnn_kernel(%arg0: i32, %arg1: memref<256x8xf32, #tpu.memory_space<vmem>>, %arg2: memref<4x128x128xf32, #tpu.memory_space<vmem>>, %arg3: memref<4x1x128xf32, #tpu.memory_space<vmem>>, %arg4: memref<256x128xf32, #tpu.memory_space<vmem>>) attributes {dimension_semantics = [#tpu.dimension_semantics<parallel>], iteration_bounds = array<i64: 2>, scalar_prefetch = 0 : i64, scratch_operands = 0 : i64, tpu.core_type = #tpu.core_type<tc>, window_params = [{transform_indices = @transform_0, window_bounds = array<i64: 256, 8>}, {pipeline_mode = #tpu.pipeline_mode<synchronous>, transform_indices = @transform_1, window_bounds = array<i64: 4, 128, 128>}, {pipeline_mode = #tpu.pipeline_mode<synchronous>, transform_indices = @transform_2, window_bounds = array<i64: 4, 1, 128>}, {transform_indices = @transform_3, window_bounds = array<i64: 256, 128>}]} {
    %c0 = arith.constant 0 : index
    %c0_0 = arith.constant 0 : index
    %0 = vector.load %arg1[%c0, %c0_0] : memref<256x8xf32, #tpu.memory_space<vmem>>, vector<256x8xf32>
    %c0_1 = arith.constant 0 : index
    %c0_2 = arith.constant 0 : index
    %c0_3 = arith.constant 0 : index
    %1 = vector.load %arg2[%c0_1, %c0_2, %c0_3] : memref<4x128x128xf32, #tpu.memory_space<vmem>>, vector<1x8x128xf32>
    %2 = vector.shape_cast %1 : vector<1x8x128xf32> to vector<8x128xf32>
    %cst = arith.constant dense<0.000000e+00> : vector<256x128xf32>
    %3 = tpu.matmul %0, %2, %cst {dimension_numbers = #tpu.dot_dimension_numbers<[1], [0], [0], [1], [0, 0, 1, 1], [], []>} : vector<256x8xf32>, vector<8x128xf32>, vector<256x128xf32> -> vector<256x128xf32>
    %c0_4 = arith.constant 0 : index
    %c0_5 = arith.constant 0 : index
    %c0_6 = arith.constant 0 : index
    %4 = vector.load %arg3[%c0_4, %c0_5, %c0_6] : memref<4x1x128xf32, #tpu.memory_space<vmem>>, vector<1x1x128xf32>
    %5 = vector.shape_cast %4 : vector<1x1x128xf32> to vector<1x128xf32>
    %6 = vector.broadcast %5 : vector<1x128xf32> to vector<256x128xf32>
    %7 = arith.addf %3, %6 : vector<256x128xf32>
    %8 = math.tanh %7 : vector<256x128xf32>
    %c1 = arith.constant 1 : index
    %c0_7 = arith.constant 0 : index
    %c0_8 = arith.constant 0 : index
    %9 = vector.load %arg2[%c1, %c0_7, %c0_8] : memref<4x128x128xf32, #tpu.memory_space<vmem>>, vector<1x128x128xf32>
    %10 = vector.shape_cast %9 : vector<1x128x128xf32> to vector<128x128xf32>
    %cst_9 = arith.constant dense<0.000000e+00> : vector<256x128xf32>
    %11 = tpu.matmul %8, %10, %cst_9 {dimension_numbers = #tpu.dot_dimension_numbers<[1], [0], [0], [1], [0, 0, 1, 1], [], []>} : vector<256x128xf32>, vector<128x128xf32>, vector<256x128xf32> -> vector<256x128xf32>
    %c1_10 = arith.constant 1 : index
    %c0_11 = arith.constant 0 : index
    %c0_12 = arith.constant 0 : index
    %12 = vector.load %arg3[%c1_10, %c0_11, %c0_12] : memref<4x1x128xf32, #tpu.memory_space<vmem>>, vector<1x1x128xf32>
    %13 = vector.shape_cast %12 : vector<1x1x128xf32> to vector<1x128xf32>
    %14 = vector.broadcast %13 : vector<1x128xf32> to vector<256x128xf32>
    %15 = arith.addf %11, %14 : vector<256x128xf32>
    %16 = math.tanh %15 : vector<256x128xf32>
    %c2 = arith.constant 2 : index
    %c0_13 = arith.constant 0 : index
    %c0_14 = arith.constant 0 : index
    %17 = vector.load %arg2[%c2, %c0_13, %c0_14] : memref<4x128x128xf32, #tpu.memory_space<vmem>>, vector<1x128x128xf32>
    %18 = vector.shape_cast %17 : vector<1x128x128xf32> to vector<128x128xf32>
    %cst_15 = arith.constant dense<0.000000e+00> : vector<256x128xf32>
    %19 = tpu.matmul %16, %18, %cst_15 {dimension_numbers = #tpu.dot_dimension_numbers<[1], [0], [0], [1], [0, 0, 1, 1], [], []>} : vector<256x128xf32>, vector<128x128xf32>, vector<256x128xf32> -> vector<256x128xf32>
    %c2_16 = arith.constant 2 : index
    %c0_17 = arith.constant 0 : index
    %c0_18 = arith.constant 0 : index
    %20 = vector.load %arg3[%c2_16, %c0_17, %c0_18] : memref<4x1x128xf32, #tpu.memory_space<vmem>>, vector<1x1x128xf32>
    %21 = vector.shape_cast %20 : vector<1x1x128xf32> to vector<1x128xf32>
    %22 = vector.broadcast %21 : vector<1x128xf32> to vector<256x128xf32>
    %23 = arith.addf %19, %22 : vector<256x128xf32>
    %24 = math.tanh %23 : vector<256x128xf32>
    %c3 = arith.constant 3 : index
    %c0_19 = arith.constant 0 : index
    %c0_20 = arith.constant 0 : index
    %25 = vector.load %arg2[%c3, %c0_19, %c0_20] : memref<4x128x128xf32, #tpu.memory_space<vmem>>, vector<1x128x128xf32>
    %26 = vector.shape_cast %25 : vector<1x128x128xf32> to vector<128x128xf32>
    %cst_21 = arith.constant dense<0.000000e+00> : vector<256x128xf32>
    %27 = tpu.matmul %24, %26, %cst_21 {dimension_numbers = #tpu.dot_dimension_numbers<[1], [0], [0], [1], [0, 0, 1, 1], [], []>} : vector<256x128xf32>, vector<128x128xf32>, vector<256x128xf32> -> vector<256x128xf32>
    %c3_22 = arith.constant 3 : index
    %c0_23 = arith.constant 0 : index
    %c0_24 = arith.constant 0 : index
    %28 = vector.load %arg3[%c3_22, %c0_23, %c0_24] : memref<4x1x128xf32, #tpu.memory_space<vmem>>, vector<1x1x128xf32>
    %29 = vector.shape_cast %28 : vector<1x1x128xf32> to vector<1x128xf32>
    %30 = vector.broadcast %29 : vector<1x128xf32> to vector<256x128xf32>
    %31 = arith.addf %27, %30 : vector<256x128xf32>
    %c0_25 = arith.constant 0 : index
    %c0_26 = arith.constant 0 : index
    %32 = vector.load %arg4[%c0_25, %c0_26] : memref<256x128xf32, #tpu.memory_space<vmem>>, vector<256x128xf32>
    tpu.vector_store %arg4[%c0_25, %c0_26], %31 {strides = array<i32>} : memref<256x128xf32, #tpu.memory_space<vmem>>, vector<256x128xf32>,
    return
  }
  func.func @transform_0(%arg0: i32) -> (i32, i32) {
    %c0_i32 = arith.constant 0 : i32
    %c0_i32_0 = arith.constant 0 : i32
    return %arg0, %c0_i32 : i32, i32
  }
  func.func @transform_1(%arg0: i32) -> (i32, i32, i32) {
    %c0_i32 = arith.constant 0 : i32
    %c0_i32_0 = arith.constant 0 : i32
    %c0_i32_1 = arith.constant 0 : i32
    %c0_i32_2 = arith.constant 0 : i32
    return %c0_i32, %c0_i32_0, %c0_i32_1 : i32, i32, i32
  }
  func.func @transform_2(%arg0: i32) -> (i32, i32, i32) {
    %c0_i32 = arith.constant 0 : i32
    %c0_i32_0 = arith.constant 0 : i32
    %c0_i32_1 = arith.constant 0 : i32
    %c0_i32_2 = arith.constant 0 : i32
    return %c0_i32, %c0_i32_0, %c0_i32_1 : i32, i32, i32
  }
  func.func @transform_3(%arg0: i32) -> (i32, i32) {
    %c0_i32 = arith.constant 0 : i32
    %c0_i32_0 = arith.constant 0 : i32
    return %arg0, %c0_i32 : i32, i32
  }
}

</mosaic_0001>

<llo_original>
// kernel: _forward_jit.1
$region0: #{_forward_jit.1}
  #allocation0 [shape = 'u32[]', space=smem, size = 0x4, offset = 0x4, fixed_abs, tag = 'smem constant byte address 0x4 - core index']
  #allocation1 [shape = 'u32[144,128]{1,0:T(1,128)}', space=vmem, size = 0x12000, scoped, tag = 'internal scratch']
  %s0 = inlined_call_operand.vmem [shape: f32[512,8], index: 0, kind: input, shape index: {}]
  %s1 = inlined_call_operand.vmem [shape: f32[4,128,128], index: 1, kind: input, shape index: {}]
  %s2 = inlined_call_operand.vmem [shape: f32[4,1,128], index: 2, kind: input, shape index: {}]
  %s3 = inlined_call_operand.vmem [shape: f32[512,128], index: 3, kind: output, shape index: {}]
  %s4 = sld [smem:[#allocation0]]
  $region45: #{_forward_jit.1} parent=0
    _
  %s6 = ssub.s32 1, %s4
  %s7 = scalar_select 0, %s6, %s4
  loop: start=0, step=1, limit=4
  $region2: #{_forward_jit.1} parent=0 // loop_pre_header
    _
  $region3: #{_forward_jit.1} parent=0 // loop_header
    %s9 = sphi 0, %s13
    %p10 = scmp.ge.s32.totalorder %s9, 4
    %s19 = sphi 0, %s21
    %s22 = sphi 0, %s19
    %s23 = sphi 0, %s22
    %s39 = sphi 0, %s23
    %s43 = sphi 0, %s43
    %s45 = sphi 0, %s43
    %s46 = sphi 0, %s45
    %s60 = sphi 0, %s46
    %s64 = sphi 0, %s64
    %s66 = sphi 0, %s64
    %s67 = sphi 0, %s66
    %s81 = sphi 0, %s67
    %s87 = sphi 0, %s89
    %s90 = sphi 0, %s87
    %s91 = sphi 0, %s90
    %s107 = sphi 0, %s91
  $region4: #{_forward_jit.1} parent=0 // loop_header_branch
    %12 = sbr.rel (%p10) target = $region8
  $region5: #{_forward_jit.1} parent=0 // loop_body
    %s14 = ssub.s32 %s9, 1
    %s15 = ssub.s32 %s9, 2
    %s16 = sadd.s32 %s9, 1
    %s17 = ssub.s32 %s9, %s16
    %p18 = scmp.eq.s32.totalorder %s17, 0
    %s20 = sadd.s32 %s19, 1
    %s21 = scalar_select %p18, %s19, %s20
    %p24 = pneg %p18
    %p25 = scmp.eq.s32.totalorder %s9, 1
    %p26 = por %p24, %p25
    %p27 = scmp.ne.s32.totalorder %s19, %s22
    %p28 = scmp.eq.s32.totalorder %s9, 0
    %p29 = por %p27, %p28
    %p30 = scmp.ne.s32.totalorder %s19, %s22
    %p31 = scmp.eq.s32.totalorder %s14, 1
    %p32 = por %p30, %p31
    %p33 = scmp.ne.s32.totalorder %s22, %s23
    %p34 = scmp.eq.s32.totalorder %s14, 0
    %p35 = por %p33, %p34
    %p36 = scmp.ne.s32.totalorder %s22, %s23
    %p37 = scmp.eq.s32.totalorder %s15, 1
    %p38 = por %p36, %p37
    %p40 = scmp.ne.s32.totalorder %s23, %s39
    %p41 = scmp.eq.s32.totalorder %s15, 0
    %p42 = por %p40, %p41
    %s44 = sadd.s32 %s43, 1
    %p47 = scmp.eq.s32.totalorder %s9, 1
    %p48 = scmp.ne.s32.totalorder %s43, %s45
    %p49 = scmp.eq.s32.totalorder %s9, 0
    %p50 = por %p48, %p49
    %p51 = scmp.ne.s32.totalorder %s43, %s45
    %p52 = scmp.eq.s32.totalorder %s14, 1
    %p53 = por %p51, %p52
    %p54 = scmp.ne.s32.totalorder %s45, %s46
    %p55 = scmp.eq.s32.totalorder %s14, 0
    %p56 = por %p54, %p55
    %p57 = scmp.ne.s32.totalorder %s45, %s46
    %p58 = scmp.eq.s32.totalorder %s15, 1
    %p59 = por %p57, %p58
    %p61 = scmp.ne.s32.totalorder %s46, %s60
    %p62 = scmp.eq.s32.totalorder %s15, 0
    %p63 = por %p61, %p62
    %s65 = sadd.s32 %s64, 1
    %p68 = scmp.eq.s32.totalorder %s9, 1
    %p69 = scmp.ne.s32.totalorder %s64, %s66
    %p70 = scmp.eq.s32.totalorder %s9, 0
    %p71 = por %p69, %p70
    %p72 = scmp.ne.s32.totalorder %s64, %s66
    %p73 = scmp.eq.s32.totalorder %s14, 1
    %p74 = por %p72, %p73
    %p75 = scmp.ne.s32.totalorder %s66, %s67
    %p76 = scmp.eq.s32.totalorder %s14, 0
    %p77 = por %p75, %p76
    %p78 = scmp.ne.s32.totalorder %s66, %s67
    %p79 = scmp.eq.s32.totalorder %s15, 1
    %p80 = por %p78, %p79
    %p82 = scmp.ne.s32.totalorder %s67, %s81
    %p83 = scmp.eq.s32.totalorder %s15, 0
    %p84 = por %p82, %p83
    %s85 = ssub.s32 %s9, %s16
    %p86 = scmp.eq.s32.totalorder %s85, 0
    %s88 = sadd.s32 %s87, 1
    %s89 = scalar_select %p86, %s87, %s88
    %p92 = pneg %p86
    %p93 = scmp.eq.s32.totalorder %s9, 1
    %p94 = por %p92, %p93
    %p95 = scmp.ne.s32.totalorder %s87, %s90
    %p96 = scmp.eq.s32.totalorder %s9, 0
    %p97 = por %p95, %p96
    %p98 = scmp.ne.s32.totalorder %s87, %s90
    %p99 = scmp.eq.s32.totalorder %s14, 1
    %p100 = por %p98, %p99
    %p101 = scmp.ne.s32.totalorder %s90, %s91
    %p102 = scmp.eq.s32.totalorder %s14, 0
    %p103 = por %p101, %p102
    %p104 = scmp.ne.s32.totalorder %s90, %s91
    %p105 = scmp.eq.s32.totalorder %s15, 1
    %p106 = por %p104, %p105
    %p108 = scmp.ne.s32.totalorder %s91, %s107
    %p109 = scmp.eq.s32.totalorder %s15, 0
    %p110 = por %p108, %p109
    %p111 = scmp.le.s32.totalorder 1, %s9
    %p112 = scmp.lt.s32.totalorder %s9, 3
    %p113 = pnand %p111, %p112
    %p114 = pneg %p113
    // Predicated region
    $region9: #{_forward_jit.1} parent=5 // pred_check
      _
    $region10: #{_forward_jit.1} parent=5 // pred_check_branch
      %116 = sbr.rel (%p113) target = $region12
    $region11: #{_forward_jit.1} parent=5 // pred_region
      %s117 = ssub.s32 %s9, 1
      // Predicated region
      $region13: #{_forward_jit.1} parent=11 // pred_check
        %p118 = pneg %p56
      $region14: #{_forward_jit.1} parent=11 // pred_check_branch
        %120 = sbr.rel (%p118) target = $region16
      $region15: #{_forward_jit.1} parent=11 // pred_region
        _
      $region16: #{_forward_jit.1} parent=11 // pred_fallthru
        _
      // Predicated region
      $region17: #{_forward_jit.1} parent=11 // pred_check
        %p121 = pneg %p77
      $region18: #{_forward_jit.1} parent=11 // pred_check_branch
        %123 = sbr.rel (%p121) target = $region20
      $region19: #{_forward_jit.1} parent=11 // pred_region
        _
      $region20: #{_forward_jit.1} parent=11 // pred_fallthru
        _
    $region12: #{_forward_jit.1} parent=5 // pred_fallthru
      _
    %p124 = scmp.lt.s32.totalorder %s9, 2
    // Predicated region
    $region21: #{_forward_jit.1} parent=5 // pred_check
      %p125 = pneg %p124
    $region22: #{_forward_jit.1} parent=5 // pred_check_branch
      %127 = sbr.rel (%p125) target = $region24
    $region23: #{_forward_jit.1} parent=5 // pred_region
      // Predicated region
      $region25: #{_forward_jit.1} parent=23 // pred_check
        %p128 = pneg %p29
      $region26: #{_forward_jit.1} parent=23 // pred_check_branch
        %130 = sbr.rel (%p128) target = $region28
      $region27: #{_forward_jit.1} parent=23 // pred_region
        %s131 = smul.u32 32, %s9
        %p132 = scmp.lt.s32.totalorder %s131, 63
        %s133 = scalar_select %p132, %s131, 63
        %s134 = smul.addr %s133, 8
        %s135 = scalar_lea.vmem %s0, %s134
        %s136 = smul.u32 32, %s9
      $region28: #{_forward_jit.1} parent=23 // pred_fallthru
        _
    $region24: #{_forward_jit.1} parent=5 // pred_fallthru
      _
    %p137 = scmp.le.s32.totalorder 1, %s9
    %p138 = scmp.lt.s32.totalorder %s9, 3
    %p139 = pnand %p137, %p138
    %p140 = pneg %p139
    // Predicated region
    $region29: #{_forward_jit.1} parent=5 // pred_check
      _
    $region30: #{_forward_jit.1} parent=5 // pred_check_branch
      %142 = sbr.rel (%p139) target = $region32
    $region31: #{_forward_jit.1} parent=5 // pred_region
      %s143 = ssub.s32 %s9, 1
      %s144 = smul.u32 32, %s14
      %p145 = scmp.lt.s32.totalorder %s144, 63
      %s146 = scalar_select %p145, %s144, 63
      %s147 = smul.addr %s146, 8
      %s148 = scalar_lea.vmem %s0, %s147
      %p149 = pneg %p35
      %p150 = pneg %p32
      %p151 = pneg %p56
      %p152 = pneg %p53
      %p153 = pneg %p77
      %p154 = pneg %p74
      %p155 = pneg %p103
      %p156 = pneg %p100
      %s157 = smul.u32 32, %s14
      %p158 = scmp.lt.s32.totalorder %s157, 63
      %s159 = scalar_select %p158, %s157, 63
      %s160 = smul.addr %s159, 8
      %s161 = scalar_lea.vmem %s3, %s160
      %s162 = smul.u32 32, %s14
      %p163 = scmp.lt.s32.totalorder %s162, 63
      %s164 = scalar_select %p163, %s162, 63
      %s165 = smul.addr %s164, 8
      %s166 = scalar_lea.vmem %s0, %s165
      %s167 = smul.u32 32, %s14
      %s168 = smul.u32 32, %s14
      %p169 = scmp.lt.s32.totalorder %s168, 63
      %s170 = scalar_select %p169, %s168, 63
      %s171 = smul.addr %s170, 8
      %s172 = scalar_lea.vmem %s3, %s171
      %s173 = smul.u32 32, %s14
      %v174 = vld [vmem:[%s166] sm:$0xff]
      %v175 = vld [vmem:[%s166 + $0x8] sm:$0xff]
      %v176 = vld [vmem:[%s166 + $0x10] sm:$0xff]
      %v177 = vld [vmem:[%s166 + $0x18] sm:$0xff]
      %v178 = vld [vmem:[%s166 + $0x20] sm:$0xff]
      %v179 = vld [vmem:[%s166 + $0x28] sm:$0xff]
      %v180 = vld [vmem:[%s166 + $0x30] sm:$0xff]
      %v181 = vld [vmem:[%s166 + $0x38] sm:$0xff]
      %v182 = vld [vmem:[%s166 + $0x40] sm:$0xff]
      %v183 = vld [vmem:[%s166 + $0x48] sm:$0xff]
      %v184 = vld [vmem:[%s166 + $0x50] sm:$0xff]
      %v185 = vld [vmem:[%s166 + $0x58] sm:$0xff]
      %v186 = vld [vmem:[%s166 + $0x60] sm:$0xff]
      %v187 = vld [vmem:[%s166 + $0x68] sm:$0xff]
      %v188 = vld [vmem:[%s166 + $0x70] sm:$0xff]
      %v189 = vld [vmem:[%s166 + $0x78] sm:$0xff]
      %v190 = vld [vmem:[%s166 + $0x80] sm:$0xff]
      %v191 = vld [vmem:[%s166 + $0x88] sm:$0xff]
      %v192 = vld [vmem:[%s166 + $0x90] sm:$0xff]
      %v193 = vld [vmem:[%s166 + $0x98] sm:$0xff]
      %v194 = vld [vmem:[%s166 + $0xa0] sm:$0xff]
      %v195 = vld [vmem:[%s166 + $0xa8] sm:$0xff]
      %v196 = vld [vmem:[%s166 + $0xb0] sm:$0xff]
      %v197 = vld [vmem:[%s166 + $0xb8] sm:$0xff]
      %v198 = vld [vmem:[%s166 + $0xc0] sm:$0xff]
      %v199 = vld [vmem:[%s166 + $0xc8] sm:$0xff]
      %v200 = vld [vmem:[%s166 + $0xd0] sm:$0xff]
      %v201 = vld [vmem:[%s166 + $0xd8] sm:$0xff]
      %v202 = vld [vmem:[%s166 + $0xe0] sm:$0xff]
      %v203 = vld [vmem:[%s166 + $0xe8] sm:$0xff]
      %v204 = vld [vmem:[%s166 + $0xf0] sm:$0xff]
      %v205 = vld [vmem:[%s166 + $0xf8] sm:$0xff]
      %v206 = vld [vmem:[%s1] sm:$0xff]
      %v207 = vld [vmem:[%s2] sm:$0x1]
      %v209 = vlaneseq
      %v210 = vshrl.u32 %v209, 7
      %v211 = vsub.s32 0, %v210
      %v212 = vrot.slane %v207, %v211
      %vm214 = vcmask 64512
      %v216 = vsel %vm214, %v174, 0
      %v219 = vsel %vm214, %v175, 0
      %v222 = vsel %vm214, %v176, 0
      %v225 = vsel %vm214, %v177, 0
      %v228 = vsel %vm214, %v178, 0
      %v231 = vsel %vm214, %v179, 0
      %v234 = vsel %vm214, %v180, 0
      %v237 = vsel %vm214, %v181, 0
      %v240 = vsel %vm214, %v182, 0
      %v243 = vsel %vm214, %v183, 0
      %v246 = vsel %vm214, %v184, 0
      %v249 = vsel %vm214, %v185, 0
      %v252 = vsel %vm214, %v186, 0
      %v255 = vsel %vm214, %v187, 0
      %v258 = vsel %vm214, %v188, 0
      %v261 = vsel %vm214, %v189, 0
      %v264 = vsel %vm214, %v190, 0
      %v267 = vsel %vm214, %v191, 0
      %v270 = vsel %vm214, %v192, 0
      %v273 = vsel %vm214, %v193, 0
      %v276 = vsel %vm214, %v194, 0
      %v279 = vsel %vm214, %v195, 0
      %v282 = vsel %vm214, %v196, 0
      %v285 = vsel %vm214, %v197, 0
      %v288 = vsel %vm214, %v198, 0
      %v291 = vsel %vm214, %v199, 0
      %v294 = vsel %vm214, %v200, 0
      %v297 = vsel %vm214, %v201, 0
      %v300 = vsel %vm214, %v202, 0
      %v303 = vsel %vm214, %v203, 0
      %v306 = vsel %vm214, %v204, 0
      %v309 = vsel %vm214, %v205, 0
      %311 = vmatprep.subr.mxu0 0.0
      %312 = vmatpush1.msra.mxu0 %v206
      %313 = vmatprep.subr.mxu0 0.0
      %314 = vmatpush1.msra.mxu0 0.0
      %315 = vmatprep.subr.mxu0 0.0
      %316 = vmatpush1.msra.mxu0 0.0
      %317 = vmatprep.subr.mxu0 0.0
      %318 = vmatpush1.msra.mxu0 0.0
      %319 = vmatprep.subr.mxu0 0.0
      %320 = vmatpush1.msra.mxu0 0.0
      %321 = vmatprep.subr.mxu0 0.0
      %322 = vmatpush1.msra.mxu0 0.0
      %323 = vmatprep.subr.mxu0 0.0
      %324 = vmatpush1.msra.mxu0 0.0
      %325 = vmatprep.subr.mxu0 0.0
      %326 = vmatpush1.msra.mxu0 0.0
      %327 = vmatprep.subr.mxu0 0.0
      %328 = vmatpush1.msra.mxu0 0.0
      %329 = vmatprep.subr.mxu0 0.0
      %330 = vmatpush1.msra.mxu0 0.0
      %331 = vmatprep.subr.mxu0 0.0
      %332 = vmatpush1.msra.mxu0 0.0
      %333 = vmatprep.subr.mxu0 0.0
      %334 = vmatpush1.msra.mxu0 0.0
      %335 = vmatprep.subr.mxu0 0.0
      %336 = vmatpush1.msra.mxu0 0.0
      %337 = vmatprep.subr.mxu0 0.0
      %338 = vmatpush1.msra.mxu0 0.0
      %339 = vmatprep.subr.mxu0 0.0
      %340 = vmatpush1.msra.mxu0 0.0
      %341 = vmatprep.subr.mxu0 0.0
      %342 = vmatpush1.msra.mxu0 0.0
      %343 = vmatprep.subr.mxu0 0.0
      %344 = vmatpush1.msra.mxu0 0.0
      %345 = vmatprep.subr.mxu0 0.0
      %346 = vmatpush1.msra.mxu0 0.0
      %347 = vmatprep.subr.mxu0 0.0
      %348 = vmatpush1.msra.mxu0 0.0
      %349 = vmatprep.subr.mxu0 0.0
      %350 = vmatpush1.msra.mxu0 0.0
      %351 = vmatprep.subr.mxu0 0.0
      %352 = vmatpush1.msra.mxu0 0.0
      %353 = vmatprep.subr.mxu0 0.0
      %354 = vmatpush1.msra.mxu0 0.0
      %355 = vmatprep.subr.mxu0 0.0
      %356 = vmatpush1.msra.mxu0 0.0
      %357 = vmatprep.subr.mxu0 0.0
      %358 = vmatpush1.msra.mxu0 0.0
      %359 = vmatprep.subr.mxu0 0.0
      %360 = vmatpush1.msra.mxu0 0.0
      %361 = vmatprep.subr.mxu0 0.0
      %362 = vmatpush1.msra.mxu0 0.0
      %363 = vmatprep.subr.mxu0 0.0
      %364 = vmatpush1.msra.mxu0 0.0
      %365 = vmatprep.subr.mxu0 0.0
      %366 = vmatpush1.msra.mxu0 0.0
      %367 = vmatprep.subr.mxu0 0.0
      %368 = vmatpush1.msra.mxu0 0.0
      %369 = vmatprep.subr.mxu0 0.0
      %370 = vmatpush1.msra.mxu0 0.0
      %371 = vmatprep.subr.mxu0 0.0
      %372 = vmatpush1.msra.mxu0 0.0
      %373 = vmatprep.subr.mxu0 0.0
      %374 = vmatpush1.msra.mxu0 0.0
      %375 = vmatprep.mubr.f32.mxu0 0.0
      %376 = vmatmul.mubr.f32.gmra.mrb[0].mxu0 %v216
      %v377 = vpop.f32.mrb[0].mxu0
      %v378 = vadd.f32 %v212, %v377
      %v379 = vpop.f32.mrb[0].mxu0
      %380 = vmatprep.mubr.f32.mxu0 0.0
      %381 = vmatmul.mubr.f32.gmra.mrb[0].mxu0 %v219
      %v382 = vpop.f32.mrb[0].mxu0
      %v383 = vadd.f32 %v212, %v382
      %v384 = vpop.f32.mrb[0].mxu0
      %385 = vmatprep.mubr.f32.mxu0 0.0
      %386 = vmatmul.mubr.f32.gmra.mrb[0].mxu0 %v222
      %v387 = vpop.f32.mrb[0].mxu0
      %v388 = vadd.f32 %v212, %v387
      %v389 = vpop.f32.mrb[0].mxu0
      %390 = vmatprep.mubr.f32.mxu0 0.0
      %391 = vmatmul.mubr.f32.gmra.mrb[0].mxu0 %v225
      %v392 = vpop.f32.mrb[0].mxu0
      %v393 = vadd.f32 %v212, %v392
      %v394 = vpop.f32.mrb[0].mxu0
      %395 = vmatprep.mubr.f32.mxu0 0.0
      %396 = vmatmul.mubr.f32.gmra.mrb[0].mxu0 %v228
      %v397 = vpop.f32.mrb[0].mxu0
      %v398 = vadd.f32 %v212, %v397
      %v399 = vpop.f32.mrb[0].mxu0
      %400 = vmatprep.mubr.f32.mxu0 0.0
      %401 = vmatmul.mubr.f32.gmra.mrb[0].mxu0 %v231
      %v402 = vpop.f32.mrb[0].mxu0
      %v403 = vadd.f32 %v212, %v402
      %v404 = vpop.f32.mrb[0].mxu0
      %405 = vmatprep.mubr.f32.mxu0 0.0
      %406 = vmatmul.mubr.f32.gmra.mrb[0].mxu0 %v234
      %v407 = vpop.f32.mrb[0].mxu0
      %v408 = vadd.f32 %v212, %v407
      %v409 = vpop.f32.mrb[0].mxu0
      %410 = vmatprep.mubr.f32.mxu0 0.0
      %411 = vmatmul.mubr.f32.gmra.mrb[0].mxu0 %v237
      %v412 = vpop.f32.mrb[0].mxu0
      %v413 = vadd.f32 %v212, %v412
      %v414 = vpop.f32.mrb[0].mxu0
      %415 = vmatprep.mubr.f32.mxu0 0.0
      %416 = vmatmul.mubr.f32.gmra.mrb[0].mxu0 %v240
      %v417 = vpop.f32.mrb[0].mxu0
      %v418 = vadd.f32 %v212, %v417
      %v419 = vpop.f32.mrb[0].mxu0
      %420 = vmatprep.mubr.f32.mxu0 0.0
      %421 = vmatmul.mubr.f32.gmra.mrb[0].mxu0 %v243
      %v422 = vpop.f32.mrb[0].mxu0
      %v423 = vadd.f32 %v212, %v422
      %v424 = vpop.f32.mrb[0].mxu0
      %425 = vmatprep.mubr.f32.mxu0 0.0
      %426 = vmatmul.mubr.f32.gmra.mrb[0].mxu0 %v246
      %v427 = vpop.f32.mrb[0].mxu0
      %v428 = vadd.f32 %v212, %v427
      %v429 = vpop.f32.mrb[0].mxu0
      %430 = vmatprep.mubr.f32.mxu0 0.0
      %431 = vmatmul.mubr.f32.gmra.mrb[0].mxu0 %v249
      %v432 = vpop.f32.mrb[0].mxu0
      %v433 = vadd.f32 %v212, %v432
      %v434 = vpop.f32.mrb[0].mxu0
      %435 = vmatprep.mubr.f32.mxu0 0.0
      %436 = vmatmul.mubr.f32.gmra.mrb[0].mxu0 %v252
      %v437 = vpop.f32.mrb[0].mxu0
      %v438 = vadd.f32 %v212, %v437
      %v439 = vpop.f32.mrb[0].mxu0
      %440 = vmatprep.mubr.f32.mxu0 0.0
      %441 = vmatmul.mubr.f32.gmra.mrb[0].mxu0 %v255
      %v442 = vpop.f32.mrb[0].mxu0
      %v443 = vadd.f32 %v212, %v442
      %v444 = vpop.f32.mrb[0].mxu0
      %445 = vmatprep.mubr.f32.mxu0 0.0
      %446 = vmatmul.mubr.f32.gmra.mrb[0].mxu0 %v258
      %v447 = vpop.f32.mrb[0].mxu0
      %v448 = vadd.f32 %v212, %v447
      %v449 = vpop.f32.mrb[0].mxu0
      %450 = vmatprep.mubr.f32.mxu0 0.0
      %451 = vmatmul.mubr.f32.gmra.mrb[0].mxu0 %v261
      %v452 = vpop.f32.mrb[0].mxu0
      %v453 = vadd.f32 %v212, %v452
      %v454 = vpop.f32.mrb[0].mxu0
      %455 = vmatprep.mubr.f32.mxu0 0.0
      %456 = vmatmul.mubr.f32.gmra.mrb[0].mxu0 %v264
      %v457 = vpop.f32.mrb[0].mxu0
      %v458 = vadd.f32 %v212, %v457
      %v459 = vpop.f32.mrb[0].mxu0
      %460 = vmatprep.mubr.f32.mxu0 0.0
      %461 = vmatmul.mubr.f32.gmra.mrb[0].mxu0 %v267
      %v462 = vpop.f32.mrb[0].mxu0
      %v463 = vadd.f32 %v212, %v462
      %v464 = vpop.f32.mrb[0].mxu0
      %465 = vmatprep.mubr.f32.mxu0 0.0
      %466 = vmatmul.mubr.f32.gmra.mrb[0].mxu0 %v270
      %v467 = vpop.f32.mrb[0].mxu0
      %v468 = vadd.f32 %v212, %v467
      %v469 = vpop.f32.mrb[0].mxu0
      %470 = vmatprep.mubr.f32.mxu0 0.0
      %471 = vmatmul.mubr.f32.gmra.mrb[0].mxu0 %v273
      %v472 = vpop.f32.mrb[0].mxu0
      %v473 = vadd.f32 %v212, %v472
      %v474 = vpop.f32.mrb[0].mxu0
      %475 = vmatprep.mubr.f32.mxu0 0.0
      %476 = vmatmul.mubr.f32.gmra.mrb[0].mxu0 %v276
      %v477 = vpop.f32.mrb[0].mxu0
      %v478 = vadd.f32 %v212, %v477
      %v479 = vpop.f32.mrb[0].mxu0
      %480 = vmatprep.mubr.f32.mxu0 0.0
      %481 = vmatmul.mubr.f32.gmra.mrb[0].mxu0 %v279
      %v482 = vpop.f32.mrb[0].mxu0
      %v483 = vadd.f32 %v212, %v482
      %v484 = vpop.f32.mrb[0].mxu0
      %485 = vmatprep.mubr.f32.mxu0 0.0
      %486 = vmatmul.mubr.f32.gmra.mrb[0].mxu0 %v282
      %v487 = vpop.f32.mrb[0].mxu0
      %v488 = vadd.f32 %v212, %v487
      %v489 = vpop.f32.mrb[0].mxu0
      %490 = vmatprep.mubr.f32.mxu0 0.0
      %491 = vmatmul.mubr.f32.gmra.mrb[0].mxu0 %v285
      %v492 = vpop.f32.mrb[0].mxu0
      %v493 = vadd.f32 %v212, %v492
      %v494 = vpop.f32.mrb[0].mxu0
      %495 = vmatprep.mubr.f32.mxu0 0.0
      %496 = vmatmul.mubr.f32.gmra.mrb[0].mxu0 %v288
      %v497 = vpop.f32.mrb[0].mxu0
      %v498 = vadd.f32 %v212, %v497
      %v499 = vpop.f32.mrb[0].mxu0
      %500 = vmatprep.mubr.f32.mxu0 0.0
      %501 = vmatmul.mubr.f32.gmra.mrb[0].mxu0 %v291
      %v502 = vpop.f32.mrb[0].mxu0
      %v503 = vadd.f32 %v212, %v502
      %v504 = vpop.f32.mrb[0].mxu0
      %505 = vmatprep.mubr.f32.mxu0 0.0
      %506 = vmatmul.mubr.f32.gmra.mrb[0].mxu0 %v294
      %v507 = vpop.f32.mrb[0].mxu0
      %v508 = vadd.f32 %v212, %v507
      %v509 = vpop.f32.mrb[0].mxu0
      %510 = vmatprep.mubr.f32.mxu0 0.0
      %511 = vmatmul.mubr.f32.gmra.mrb[0].mxu0 %v297
      %v512 = vpop.f32.mrb[0].mxu0
      %v513 = vadd.f32 %v212, %v512
      %v514 = vpop.f32.mrb[0].mxu0
      %515 = vmatprep.mubr.f32.mxu0 0.0
      %516 = vmatmul.mubr.f32.gmra.mrb[0].mxu0 %v300
      %v517 = vpop.f32.mrb[0].mxu0
      %v518 = vadd.f32 %v212, %v517
      %v519 = vpop.f32.mrb[0].mxu0
      %520 = vmatprep.mubr.f32.mxu0 0.0
      %521 = vmatmul.mubr.f32.gmra.mrb[0].mxu0 %v303
      %v522 = vpop.f32.mrb[0].mxu0
      %v523 = vadd.f32 %v212, %v522
      %v524 = vpop.f32.mrb[0].mxu0
      %525 = vmatprep.mubr.f32.mxu0 0.0
      %526 = vmatmul.mubr.f32.gmra.mrb[0].mxu0 %v306
      %v527 = vpop.f32.mrb[0].mxu0
      %v528 = vadd.f32 %v212, %v527
      %v529 = vpop.f32.mrb[0].mxu0
      %530 = vmatprep.mubr.f32.mxu0 0.0
      %531 = vmatmul.mubr.f32.gmra.mrb[0].mxu0 %v309
      %v532 = vpop.f32.mrb[0].mxu0
      %v533 = vadd.f32 %v212, %v532
      %v534 = vpop.f32.mrb[0].mxu0
      %535 = vdwg.mxu0
      %v536 = vtanh.pop %v378
      %v537 = vtanh.pop %v383
      %v538 = vtanh.pop %v388
      %v539 = vtanh.pop %v393
      %v540 = vtanh.pop %v398
      %v541 = vtanh.pop %v403
      %v542 = vtanh.pop %v408
      %v543 = vtanh.pop %v413
      %v544 = vtanh.pop %v418
      %v545 = vtanh.pop %v423
      %v546 = vtanh.pop %v428
      %v547 = vtanh.pop %v433
      %v548 = vtanh.pop %v438
      %v549 = vtanh.pop %v443
      %v550 = vtanh.pop %v448
      %v551 = vtanh.pop %v453
      %v552 = vtanh.pop %v458
      %v553 = vtanh.pop %v463
      %v554 = vtanh.pop %v468
      %v555 = vtanh.pop %v473
      %v556 = vtanh.pop %v478
      %v557 = vtanh.pop %v483
      %v558 = vtanh.pop %v488
      %v559 = vtanh.pop %v493
      %v560 = vtanh.pop %v498
      %v561 = vtanh.pop %v503
      %v562 = vtanh.pop %v508
      %v563 = vtanh.pop %v513
      %v564 = vtanh.pop %v518
      %v565 = vtanh.pop %v523
      %v566 = vtanh.pop %v528
      %v567 = vtanh.pop %v533
      %s568 = scalar_lea.vmem %s1, 128
      %v569 = vld [vmem:[%s568] sm:$0xff]
      %v570 = vld [vmem:[%s568 + $0x8] sm:$0xff]
      %v571 = vld [vmem:[%s568 + $0x10] sm:$0xff]
      %v572 = vld [vmem:[%s568 + $0x18] sm:$0xff]
      %v573 = vld [vmem:[%s568 + $0x20] sm:$0xff]
      %v574 = vld [vmem:[%s568 + $0x28] sm:$0xff]
      %v575 = vld [vmem:[%s568 + $0x30] sm:$0xff]
      %v576 = vld [vmem:[%s568 + $0x38] sm:$0xff]
      %v577 = vld [vmem:[%s568 + $0x40] sm:$0xff]
      %v578 = vld [vmem:[%s568 + $0x48] sm:$0xff]
      %v579 = vld [vmem:[%s568 + $0x50] sm:$0xff]
      %v580 = vld [vmem:[%s568 + $0x58] sm:$0xff]
      %v581 = vld [vmem:[%s568 + $0x60] sm:$0xff]
      %v582 = vld [vmem:[%s568 + $0x68] sm:$0xff]
      %v583 = vld [vmem:[%s568 + $0x70] sm:$0xff]
      %v584 = vld [vmem:[%s568 + $0x78] sm:$0xff]
      %s585 = scalar_lea.vmem %s2, 1
      %v586 = vld [vmem:[%s585] sm:$0x1]
      %v588 = vlaneseq
      %v589 = vshrl.u32 %v588, 7
      %v590 = vsub.s32 0, %v589
      %v591 = vrot.slane %v586, %v590
      %593 = vmatprep.subr.mxu0 0.0
      %594 = vmatpush1.msra.mxu0 %v569
      %595 = vmatprep.subr.mxu0 0.0
      %596 = vmatpush1.msra.mxu0 %v570
      %597 = vmatprep.subr.mxu0 0.0
      %598 = vmatpush1.msra.mxu0 %v571
      %599 = vmatprep.subr.mxu0 0.0
      %600 = vmatpush1.msra.mxu0 %v572
      %601 = vmatprep.subr.mxu0 0.0
      %602 = vmatpush1.msra.mxu0 %v573
      %603 = vmatprep.subr.mxu0 0.0
      %604 = vmatpush1.msra.mxu0 %v574
      %605 = vmatprep.subr.mxu0 0.0
      %606 = vmatpush1.msra.mxu0 %v575
      %607 = vmatprep.subr.mxu0 0.0
      %608 = vmatpush1.msra.mxu0 %v576
      %609 = vmatprep.subr.mxu0 0.0
      %610 = vmatpush1.msra.mxu0 %v577
      %611 = vmatprep.subr.mxu0 0.0
      %612 = vmatpush1.msra.mxu0 %v578
      %613 = vmatprep.subr.mxu0 0.0
      %614 = vmatpush1.msra.mxu0 %v579
      %615 = vmatprep.subr.mxu0 0.0
      %616 = vmatpush1.msra.mxu0 %v580
      %617 = vmatprep.subr.mxu0 0.0
      %618 = vmatpush1.msra.mxu0 %v581
      %619 = vmatprep.subr.mxu0 0.0
      %620 = vmatpush1.msra.mxu0 %v582
      %621 = vmatprep.subr.mxu0 0.0
      %622 = vmatpush1.msra.mxu0 %v583
      %623 = vmatprep.subr.mxu0 0.0
      %624 = vmatpush1.msra.mxu0 %v584
      %625 = vmatprep.subr.mxu0 0.0
      %626 = vmatpush1.msra.mxu0 0.0
      %627 = vmatprep.subr.mxu0 0.0
      %628 = vmatpush1.msra.mxu0 0.0
      %629 = vmatprep.subr.mxu0 0.0
      %630 = vmatpush1.msra.mxu0 0.0
      %631 = vmatprep.subr.mxu0 0.0
      %632 = vmatpush1.msra.mxu0 0.0
      %633 = vmatprep.subr.mxu0 0.0
      %634 = vmatpush1.msra.mxu0 0.0
      %635 = vmatprep.subr.mxu0 0.0
      %636 = vmatpush1.msra.mxu0 0.0
      %637 = vmatprep.subr.mxu0 0.0
      %638 = vmatpush1.msra.mxu0 0.0
      %639 = vmatprep.subr.mxu0 0.0
      %640 = vmatpush1.msra.mxu0 0.0
      %641 = vmatprep.subr.mxu0 0.0
      %642 = vmatpush1.msra.mxu0 0.0
      %643 = vmatprep.subr.mxu0 0.0
      %644 = vmatpush1.msra.mxu0 0.0
      %645 = vmatprep.subr.mxu0 0.0
      %646 = vmatpush1.msra.mxu0 0.0
      %647 = vmatprep.subr.mxu0 0.0
      %648 = vmatpush1.msra.mxu0 0.0
      %649 = vmatprep.subr.mxu0 0.0
      %650 = vmatpush1.msra.mxu0 0.0
      %651 = vmatprep.subr.mxu0 0.0
      %652 = vmatpush1.msra.mxu0 0.0
      %653 = vmatprep.subr.mxu0 0.0
      %654 = vmatpush1.msra.mxu0 0.0
      %655 = vmatprep.subr.mxu0 0.0
      %656 = vmatpush1.msra.mxu0 0.0
      %657 = vmatprep.mubr.f32.mxu0 0.0
      %658 = vmatmul.mubr.f32.gmra.mrb[0].mxu0 %v536
      %v659 = vpop.f32.mrb[0].mxu0
      %v660 = vadd.f32 %v591, %v659
      %v661 = vpop.f32.mrb[0].mxu0
      %662 = vmatprep.mubr.f32.mxu0 0.0
      %663 = vmatmul.mubr.f32.gmra.mrb[0].mxu0 %v537
      %v664 = vpop.f32.mrb[0].mxu0
      %v665 = vadd.f32 %v591, %v664
      %v666 = vpop.f32.mrb[0].mxu0
      %667 = vmatprep.mubr.f32.mxu0 0.0
      %668 = vmatmul.mubr.f32.gmra.mrb[0].mxu0 %v538
      %v669 = vpop.f32.mrb[0].mxu0
      %v670 = vadd.f32 %v591, %v669
      %v671 = vpop.f32.mrb[0].mxu0
      %672 = vmatprep.mubr.f32.mxu0 0.0
      %673 = vmatmul.mubr.f32.gmra.mrb[0].mxu0 %v539
      %v674 = vpop.f32.mrb[0].mxu0
      %v675 = vadd.f32 %v591, %v674
      %v676 = vpop.f32.mrb[0].mxu0
      %677 = vmatprep.mubr.f32.mxu0 0.0
      %678 = vmatmul.mubr.f32.gmra.mrb[0].mxu0 %v540
      %v679 = vpop.f32.mrb[0].mxu0
      %v680 = vadd.f32 %v591, %v679
      %v681 = vpop.f32.mrb[0].mxu0
      %682 = vmatprep.mubr.f32.mxu0 0.0
      %683 = vmatmul.mubr.f32.gmra.mrb[0].mxu0 %v541
      %v684 = vpop.f32.mrb[0].mxu0
      %v685 = vadd.f32 %v591, %v684
      %v686 = vpop.f32.mrb[0].mxu0
      %687 = vmatprep.mubr.f32.mxu0 0.0
      %688 = vmatmul.mubr.f32.gmra.mrb[0].mxu0 %v542
      %v689 = vpop.f32.mrb[0].mxu0
      %v690 = vadd.f32 %v591, %v689
      %v691 = vpop.f32.mrb[0].mxu0
      %692 = vmatprep.mubr.f32.mxu0 0.0
      %693 = vmatmul.mubr.f32.gmra.mrb[0].mxu0 %v543
      %v694 = vpop.f32.mrb[0].mxu0
      %v695 = vadd.f32 %v591, %v694
      %v696 = vpop.f32.mrb[0].mxu0
      %697 = vmatprep.mubr.f32.mxu0 0.0
      %698 = vmatmul.mubr.f32.gmra.mrb[0].mxu0 %v544
      %v699 = vpop.f32.mrb[0].mxu0
      %v700 = vadd.f32 %v591, %v699
      %v701 = vpop.f32.mrb[0].mxu0
      %702 = vmatprep.mubr.f32.mxu0 0.0
      %703 = vmatmul.mubr.f32.gmra.mrb[0].mxu0 %v545
      %v704 = vpop.f32.mrb[0].mxu0
      %v705 = vadd.f32 %v591, %v704
      %v706 = vpop.f32.mrb[0].mxu0
      %707 = vmatprep.mubr.f32.mxu0 0.0
      %708 = vmatmul.mubr.f32.gmra.mrb[0].mxu0 %v546
      %v709 = vpop.f32.mrb[0].mxu0
      %v710 = vadd.f32 %v591, %v709
      %v711 = vpop.f32.mrb[0].mxu0
      %712 = vmatprep.mubr.f32.mxu0 0.0
      %713 = vmatmul.mubr.f32.gmra.mrb[0].mxu0 %v547
      %v714 = vpop.f32.mrb[0].mxu0
      %v715 = vadd.f32 %v591, %v714
      %v716 = vpop.f32.mrb[0].mxu0
      %717 = vmatprep.mubr.f32.mxu0 0.0
      %718 = vmatmul.mubr.f32.gmra.mrb[0].mxu0 %v548
      %v719 = vpop.f32.mrb[0].mxu0
      %v720 = vadd.f32 %v591, %v719
      %v721 = vpop.f32.mrb[0].mxu0
      %722 = vmatprep.mubr.f32.mxu0 0.0
      %723 = vmatmul.mubr.f32.gmra.mrb[0].mxu0 %v549
      %v724 = vpop.f32.mrb[0].mxu0
      %v725 = vadd.f32 %v591, %v724
      %v726 = vpop.f32.mrb[0].mxu0
      %727 = vmatprep.mubr.f32.mxu0 0.0
      %728 = vmatmul.mubr.f32.gmra.mrb[0].mxu0 %v550
      %v729 = vpop.f32.mrb[0].mxu0
      %v730 = vadd.f32 %v591, %v729
      %v731 = vpop.f32.mrb[0].mxu0
      %732 = vmatprep.mubr.f32.mxu0 0.0
      %733 = vmatmul.mubr.f32.gmra.mrb[0].mxu0 %v551
      %v734 = vpop.f32.mrb[0].mxu0
      %v735 = vadd.f32 %v591, %v734
      %v736 = vpop.f32.mrb[0].mxu0
      %737 = vmatprep.mubr.f32.mxu0 0.0
      %738 = vmatmul.mubr.f32.gmra.mrb[0].mxu0 %v552
      %v739 = vpop.f32.mrb[0].mxu0
      %v740 = vadd.f32 %v591, %v739
      %v741 = vpop.f32.mrb[0].mxu0
      %742 = vmatprep.mubr.f32.mxu0 0.0
      %743 = vmatmul.mubr.f32.gmra.mrb[0].mxu0 %v553
      %v744 = vpop.f32.mrb[0].mxu0
      %v745 = vadd.f32 %v591, %v744
      %v746 = vpop.f32.mrb[0].mxu0
      %747 = vmatprep.mubr.f32.mxu0 0.0
      %748 = vmatmul.mubr.f32.gmra.mrb[0].mxu0 %v554
      %v749 = vpop.f32.mrb[0].mxu0
      %v750 = vadd.f32 %v591, %v749
      %v751 = vpop.f32.mrb[0].mxu0
      %752 = vmatprep.mubr.f32.mxu0 0.0
      %753 = vmatmul.mubr.f32.gmra.mrb[0].mxu0 %v555
      %v754 = vpop.f32.mrb[0].mxu0
      %v755 = vadd.f32 %v591, %v754
      %v756 = vpop.f32.mrb[0].mxu0
      %757 = vmatprep.mubr.f32.mxu0 0.0
      %758 = vmatmul.mubr.f32.gmra.mrb[0].mxu0 %v556
      %v759 = vpop.f32.mrb[0].mxu0
      %v760 = vadd.f32 %v591, %v759
      %v761 = vpop.f32.mrb[0].mxu0
      %762 = vmatprep.mubr.f32.mxu0 0.0
      %763 = vmatmul.mubr.f32.gmra.mrb[0].mxu0 %v557
      %v764 = vpop.f32.mrb[0].mxu0
      %v765 = vadd.f32 %v591, %v764
      %v766 = vpop.f32.mrb[0].mxu0
      %767 = vmatprep.mubr.f32.mxu0 0.0
      %768 = vmatmul.mubr.f32.gmra.mrb[0].mxu0 %v558
      %v769 = vpop.f32.mrb[0].mxu0
      %v770 = vadd.f32 %v591, %v769
      %v771 = vpop.f32.mrb[0].mxu0
      %772 = vmatprep.mubr.f32.mxu0 0.0
      %773 = vmatmul.mubr.f32.gmra.mrb[0].mxu0 %v559
      %v774 = vpop.f32.mrb[0].mxu0
      %v775 = vadd.f32 %v591, %v774
      %v776 = vpop.f32.mrb[0].mxu0
      %777 = vmatprep.mubr.f32.mxu0 0.0
      %778 = vmatmul.mubr.f32.gmra.mrb[0].mxu0 %v560
      %v779 = vpop.f32.mrb[0].mxu0
      %v780 = vadd.f32 %v591, %v779
      %v781 = vpop.f32.mrb[0].mxu0
      %782 = vmatprep.mubr.f32.mxu0 0.0
      %783 = vmatmul.mubr.f32.gmra.mrb[0].mxu0 %v561
      %v784 = vpop.f32.mrb[0].mxu0
      %v785 = vadd.f32 %v591, %v784
      %v786 = vpop.f32.mrb[0].mxu0
      %787 = vmatprep.mubr.f32.mxu0 0.0
      %788 = vmatmul.mubr.f32.gmra.mrb[0].mxu0 %v562
      %v789 = vpop.f32.mrb[0].mxu0
      %v790 = vadd.f32 %v591, %v789
      %v791 = vpop.f32.mrb[0].mxu0
      %792 = vmatprep.mubr.f32.mxu0 0.0
      %793 = vmatmul.mubr.f32.gmra.mrb[0].mxu0 %v563
      %v794 = vpop.f32.mrb[0].mxu0
      %v795 = vadd.f32 %v591, %v794
      %v796 = vpop.f32.mrb[0].mxu0
      %797 = vmatprep.mubr.f32.mxu0 0.0
      %798 = vmatmul.mubr.f32.gmra.mrb[0].mxu0 %v564
      %v799 = vpop.f32.mrb[0].mxu0
      %v800 = vadd.f32 %v591, %v799
      %v801 = vpop.f32.mrb[0].mxu0
      %802 = vmatprep.mubr.f32.mxu0 0.0
      %803 = vmatmul.mubr.f32.gmra.mrb[0].mxu0 %v565
      %v804 = vpop.f32.mrb[0].mxu0
      %v805 = vadd.f32 %v591, %v804
      %v806 = vpop.f32.mrb[0].mxu0
      %807 = vmatprep.mubr.f32.mxu0 0.0
      %808 = vmatmul.mubr.f32.gmra.mrb[0].mxu0 %v566
      %v809 = vpop.f32.mrb[0].mxu0
      %v810 = vadd.f32 %v591, %v809
      %v811 = vpop.f32.mrb[0].mxu0
      %812 = vmatprep.mubr.f32.mxu0 0.0
      %813 = vmatmul.mubr.f32.gmra.mrb[0].mxu0 %v567
      %v814 = vpop.f32.mrb[0].mxu0
      %v815 = vadd.f32 %v591, %v814
      %v816 = vpop.f32.mrb[0].mxu0
      %817 = vdwg.mxu0
      %v818 = vtanh.pop %v660
      %v819 = vtanh.pop %v665
      %v820 = vtanh.pop %v670
      %v821 = vtanh.pop %v675
      %v822 = vtanh.pop %v680
      %v823 = vtanh.pop %v685
      %v824 = vtanh.pop %v690
      %v825 = vtanh.pop %v695
      %v826 = vtanh.pop %v700
      %v827 = vtanh.pop %v705
      %v828 = vtanh.pop %v710
      %v829 = vtanh.pop %v715
      %v830 = vtanh.pop %v720
      %v831 = vtanh.pop %v725
      %v832 = vtanh.pop %v730
      %v833 = vtanh.pop %v735
      %v834 = vtanh.pop %v740
      %v835 = vtanh.pop %v745
      %v836 = vtanh.pop %v750
      %v837 = vtanh.pop %v755
      %v838 = vtanh.pop %v760
      %v839 = vtanh.pop %v765
      %v840 = vtanh.pop %v770
      %v841 = vtanh.pop %v775
      %v842 = vtanh.pop %v780
      %v843 = vtanh.pop %v785
      %v844 = vtanh.pop %v790
      %v845 = vtanh.pop %v795
      %v846 = vtanh.pop %v800
      %v847 = vtanh.pop %v805
      %v848 = vtanh.pop %v810
      %v849 = vtanh.pop %v815
      %s850 = scalar_lea.vmem %s1, 256
      %v851 = vld [vmem:[%s850] sm:$0xff]
      %v852 = vld [vmem:[%s850 + $0x8] sm:$0xff]
      %v853 = vld [vmem:[%s850 + $0x10] sm:$0xff]
      %v854 = vld [vmem:[%s850 + $0x18] sm:$0xff]
      %v855 = vld [vmem:[%s850 + $0x20] sm:$0xff]
      %v856 = vld [vmem:[%s850 + $0x28] sm:$0xff]
      %v857 = vld [vmem:[%s850 + $0x30] sm:$0xff]
      %v858 = vld [vmem:[%s850 + $0x38] sm:$0xff]
      %v859 = vld [vmem:[%s850 + $0x40] sm:$0xff]
      %v860 = vld [vmem:[%s850 + $0x48] sm:$0xff]
      %v861 = vld [vmem:[%s850 + $0x50] sm:$0xff]
      %v862 = vld [vmem:[%s850 + $0x58] sm:$0xff]
      %v863 = vld [vmem:[%s850 + $0x60] sm:$0xff]
      %v864 = vld [vmem:[%s850 + $0x68] sm:$0xff]
      %v865 = vld [vmem:[%s850 + $0x70] sm:$0xff]
      %v866 = vld [vmem:[%s850 + $0x78] sm:$0xff]
      %s867 = scalar_lea.vmem %s2, 2
      %v868 = vld [vmem:[%s867] sm:$0x1]
      %v870 = vlaneseq
      %v871 = vshrl.u32 %v870, 7
      %v872 = vsub.s32 0, %v871
      %v873 = vrot.slane %v868, %v872
      %875 = vmatprep.subr.mxu0 0.0
      %876 = vmatpush1.msra.mxu0 %v851
      %877 = vmatprep.subr.mxu0 0.0
      %878 = vmatpush1.msra.mxu0 %v852
      %879 = vmatprep.subr.mxu0 0.0
      %880 = vmatpush1.msra.mxu0 %v853
      %881 = vmatprep.subr.mxu0 0.0
      %882 = vmatpush1.msra.mxu0 %v854
      %883 = vmatprep.subr.mxu0 0.0
      %884 = vmatpush1.msra.mxu0 %v855
      %885 = vmatprep.subr.mxu0 0.0
      %886 = vmatpush1.msra.mxu0 %v856
      %887 = vmatprep.subr.mxu0 0.0
      %888 = vmatpush1.msra.mxu0 %v857
      %889 = vmatprep.subr.mxu0 0.0
      %890 = vmatpush1.msra.mxu0 %v858
      %891 = vmatprep.subr.mxu0 0.0
      %892 = vmatpush1.msra.mxu0 %v859
      %893 = vmatprep.subr.mxu0 0.0
      %894 = vmatpush1.msra.mxu0 %v860
      %895 = vmatprep.subr.mxu0 0.0
      %896 = vmatpush1.msra.mxu0 %v861
      %897 = vmatprep.subr.mxu0 0.0
      %898 = vmatpush1.msra.mxu0 %v862
      %899 = vmatprep.subr.mxu0 0.0
      %900 = vmatpush1.msra.mxu0 %v863
      %901 = vmatprep.subr.mxu0 0.0
      %902 = vmatpush1.msra.mxu0 %v864
      %903 = vmatprep.subr.mxu0 0.0
      %904 = vmatpush1.msra.mxu0 %v865
      %905 = vmatprep.subr.mxu0 0.0
      %906 = vmatpush1.msra.mxu0 %v866
      %907 = vmatprep.subr.mxu0 0.0
      %908 = vmatpush1.msra.mxu0 0.0
      %909 = vmatprep.subr.mxu0 0.0
      %910 = vmatpush1.msra.mxu0 0.0
      %911 = vmatprep.subr.mxu0 0.0
      %912 = vmatpush1.msra.mxu0 0.0
      %913 = vmatprep.subr.mxu0 0.0
      %914 = vmatpush1.msra.mxu0 0.0
      %915 = vmatprep.subr.mxu0 0.0
      %916 = vmatpush1.msra.mxu0 0.0
      %917 = vmatprep.subr.mxu0 0.0
      %918 = vmatpush1.msra.mxu0 0.0
      %919 = vmatprep.subr.mxu0 0.0
      %920 = vmatpush1.msra.mxu0 0.0
      %921 = vmatprep.subr.mxu0 0.0
      %922 = vmatpush1.msra.mxu0 0.0
      %923 = vmatprep.subr.mxu0 0.0
      %924 = vmatpush1.msra.mxu0 0.0
      %925 = vmatprep.subr.mxu0 0.0
      %926 = vmatpush1.msra.mxu0 0.0
      %927 = vmatprep.subr.mxu0 0.0
      %928 = vmatpush1.msra.mxu0 0.0
      %929 = vmatprep.subr.mxu0 0.0
      %930 = vmatpush1.msra.mxu0 0.0
      %931 = vmatprep.subr.mxu0 0.0
      %932 = vmatpush1.msra.mxu0 0.0
      %933 = vmatprep.subr.mxu0 0.0
      %934 = vmatpush1.msra.mxu0 0.0
      %935 = vmatprep.subr.mxu0 0.0
      %936 = vmatpush1.msra.mxu0 0.0
      %937 = vmatprep.subr.mxu0 0.0
      %938 = vmatpush1.msra.mxu0 0.0
      %939 = vmatprep.mubr.f32.mxu0 0.0
      %940 = vmatmul.mubr.f32.gmra.mrb[0].mxu0 %v818
      %v941 = vpop.f32.mrb[0].mxu0
      %v942 = vadd.f32 %v873, %v941
      %v943 = vpop.f32.mrb[0].mxu0
      %944 = vmatprep.mubr.f32.mxu0 0.0
      %945 = vmatmul.mubr.f32.gmra.mrb[0].mxu0 %v819
      %v946 = vpop.f32.mrb[0].mxu0
      %v947 = vadd.f32 %v873, %v946
      %v948 = vpop.f32.mrb[0].mxu0
      %949 = vmatprep.mubr.f32.mxu0 0.0
      %950 = vmatmul.mubr.f32.gmra.mrb[0].mxu0 %v820
      %v951 = vpop.f32.mrb[0].mxu0
      %v952 = vadd.f32 %v873, %v951
      %v953 = vpop.f32.mrb[0].mxu0
      %954 = vmatprep.mubr.f32.mxu0 0.0
      %955 = vmatmul.mubr.f32.gmra.mrb[0].mxu0 %v821
      %v956 = vpop.f32.mrb[0].mxu0
      %v957 = vadd.f32 %v873, %v956
      %v958 = vpop.f32.mrb[0].mxu0
      %959 = vmatprep.mubr.f32.mxu0 0.0
      %960 = vmatmul.mubr.f32.gmra.mrb[0].mxu0 %v822
      %v961 = vpop.f32.mrb[0].mxu0
      %v962 = vadd.f32 %v873, %v961
      %v963 = vpop.f32.mrb[0].mxu0
      %964 = vmatprep.mubr.f32.mxu0 0.0
      %965 = vmatmul.mubr.f32.gmra.mrb[0].mxu0 %v823
      %v966 = vpop.f32.mrb[0].mxu0
      %v967 = vadd.f32 %v873, %v966
      %v968 = vpop.f32.mrb[0].mxu0
      %969 = vmatprep.mubr.f32.mxu0 0.0
      %970 = vmatmul.mubr.f32.gmra.mrb[0].mxu0 %v824
      %v971 = vpop.f32.mrb[0].mxu0
      %v972 = vadd.f32 %v873, %v971
      %v973 = vpop.f32.mrb[0].mxu0
      %974 = vmatprep.mubr.f32.mxu0 0.0
      %975 = vmatmul.mubr.f32.gmra.mrb[0].mxu0 %v825
      %v976 = vpop.f32.mrb[0].mxu0
      %v977 = vadd.f32 %v873, %v976
      %v978 = vpop.f32.mrb[0].mxu0
      %979 = vmatprep.mubr.f32.mxu0 0.0
      %980 = vmatmul.mubr.f32.gmra.mrb[0].mxu0 %v826
      %v981 = vpop.f32.mrb[0].mxu0
      %v982 = vadd.f32 %v873, %v981
      %v983 = vpop.f32.mrb[0].mxu0
      %984 = vmatprep.mubr.f32.mxu0 0.0
      %985 = vmatmul.mubr.f32.gmra.mrb[0].mxu0 %v827
      %v986 = vpop.f32.mrb[0].mxu0
      %v987 = vadd.f32 %v873, %v986
      %v988 = vpop.f32.mrb[0].mxu0
      %989 = vmatprep.mubr.f32.mxu0 0.0
      %990 = vmatmul.mubr.f32.gmra.mrb[0].mxu0 %v828
      %v991 = vpop.f32.mrb[0].mxu0
      %v992 = vadd.f32 %v873, %v991
      %v993 = vpop.f32.mrb[0].mxu0
      %994 = vmatprep.mubr.f32.mxu0 0.0
      %995 = vmatmul.mubr.f32.gmra.mrb[0].mxu0 %v829
      %v996 = vpop.f32.mrb[0].mxu0
      %v997 = vadd.f32 %v873, %v996
      %v998 = vpop.f32.mrb[0].mxu0
      %999 = vmatprep.mubr.f32.mxu0 0.0
      %1000 = vmatmul.mubr.f32.gmra.mrb[0].mxu0 %v830
      %v1001 = vpop.f32.mrb[0].mxu0
      %v1002 = vadd.f32 %v873, %v1001
      %v1003 = vpop.f32.mrb[0].mxu0
      %1004 = vmatprep.mubr.f32.mxu0 0.0
      %1005 = vmatmul.mubr.f32.gmra.mrb[0].mxu0 %v831
      %v1006 = vpop.f32.mrb[0].mxu0
      %v1007 = vadd.f32 %v873, %v1006
      %v1008 = vpop.f32.mrb[0].mxu0
      %1009 = vmatprep.mubr.f32.mxu0 0.0
      %1010 = vmatmul.mubr.f32.gmra.mrb[0].mxu0 %v832
      %v1011 = vpop.f32.mrb[0].mxu0
      %v1012 = vadd.f32 %v873, %v1011
      %v1013 = vpop.f32.mrb[0].mxu0
      %1014 = vmatprep.mubr.f32.mxu0 0.0
      %1015 = vmatmul.mubr.f32.gmra.mrb[0].mxu0 %v833
      %v1016 = vpop.f32.mrb[0].mxu0
      %v1017 = vadd.f32 %v873, %v1016
      %v1018 = vpop.f32.mrb[0].mxu0
      %1019 = vmatprep.mubr.f32.mxu0 0.0
      %1020 = vmatmul.mubr.f32.gmra.mrb[0].mxu0 %v834
      %v1021 = vpop.f32.mrb[0].mxu0
      %v1022 = vadd.f32 %v873, %v1021
      %v1023 = vpop.f32.mrb[0].mxu0
      %1024 = vmatprep.mubr.f32.mxu0 0.0
      %1025 = vmatmul.mubr.f32.gmra.mrb[0].mxu0 %v835
      %v1026 = vpop.f32.mrb[0].mxu0
      %v1027 = vadd.f32 %v873, %v1026
      %v1028 = vpop.f32.mrb[0].mxu0
      %1029 = vmatprep.mubr.f32.mxu0 0.0
      %1030 = vmatmul.mubr.f32.gmra.mrb[0].mxu0 %v836
      %v1031 = vpop.f32.mrb[0].mxu0
      %v1032 = vadd.f32 %v873, %v1031
      %v1033 = vpop.f32.mrb[0].mxu0
      %1034 = vmatprep.mubr.f32.mxu0 0.0
      %1035 = vmatmul.mubr.f32.gmra.mrb[0].mxu0 %v837
      %v1036 = vpop.f32.mrb[0].mxu0
      %v1037 = vadd.f32 %v873, %v1036
      %v1038 = vpop.f32.mrb[0].mxu0
      %1039 = vmatprep.mubr.f32.mxu0 0.0
      %1040 = vmatmul.mubr.f32.gmra.mrb[0].mxu0 %v838
      %v1041 = vpop.f32.mrb[0].mxu0
      %v1042 = vadd.f32 %v873, %v1041
      %v1043 = vpop.f32.mrb[0].mxu0
      %1044 = vmatprep.mubr.f32.mxu0 0.0
      %1045 = vmatmul.mubr.f32.gmra.mrb[0].mxu0 %v839
      %v1046 = vpop.f32.mrb[0].mxu0
      %v1047 = vadd.f32 %v873, %v1046
      %v1048 = vpop.f32.mrb[0].mxu0
      %1049 = vmatprep.mubr.f32.mxu0 0.0
      %1050 = vmatmul.mubr.f32.gmra.mrb[0].mxu0 %v840
      %v1051 = vpop.f32.mrb[0].mxu0
      %v1052 = vadd.f32 %v873, %v1051
      %v1053 = vpop.f32.mrb[0].mxu0
      %1054 = vmatprep.mubr.f32.mxu0 0.0
      %1055 = vmatmul.mubr.f32.gmra.mrb[0].mxu0 %v841
      %v1056 = vpop.f32.mrb[0].mxu0
      %v1057 = vadd.f32 %v873, %v1056
      %v1058 = vpop.f32.mrb[0].mxu0
      %1059 = vmatprep.mubr.f32.mxu0 0.0
      %1060 = vmatmul.mubr.f32.gmra.mrb[0].mxu0 %v842
      %v1061 = vpop.f32.mrb[0].mxu0
      %v1062 = vadd.f32 %v873, %v1061
      %v1063 = vpop.f32.mrb[0].mxu0
      %1064 = vmatprep.mubr.f32.mxu0 0.0
      %1065 = vmatmul.mubr.f32.gmra.mrb[0].mxu0 %v843
      %v1066 = vpop.f32.mrb[0].mxu0
      %v1067 = vadd.f32 %v873, %v1066
      %v1068 = vpop.f32.mrb[0].mxu0
      %1069 = vmatprep.mubr.f32.mxu0 0.0
      %1070 = vmatmul.mubr.f32.gmra.mrb[0].mxu0 %v844
      %v1071 = vpop.f32.mrb[0].mxu0
      %v1072 = vadd.f32 %v873, %v1071
      %v1073 = vpop.f32.mrb[0].mxu0
      %1074 = vmatprep.mubr.f32.mxu0 0.0
      %1075 = vmatmul.mubr.f32.gmra.mrb[0].mxu0 %v845
      %v1076 = vpop.f32.mrb[0].mxu0
      %v1077 = vadd.f32 %v873, %v1076
      %v1078 = vpop.f32.mrb[0].mxu0
      %1079 = vmatprep.mubr.f32.mxu0 0.0
      %1080 = vmatmul.mubr.f32.gmra.mrb[0].mxu0 %v846
      %v1081 = vpop.f32.mrb[0].mxu0
      %v1082 = vadd.f32 %v873, %v1081
      %v1083 = vpop.f32.mrb[0].mxu0
      %1084 = vmatprep.mubr.f32.mxu0 0.0
      %1085 = vmatmul.mubr.f32.gmra.mrb[0].mxu0 %v847
      %v1086 = vpop.f32.mrb[0].mxu0
      %v1087 = vadd.f32 %v873, %v1086
      %v1088 = vpop.f32.mrb[0].mxu0
      %1089 = vmatprep.mubr.f32.mxu0 0.0
      %1090 = vmatmul.mubr.f32.gmra.mrb[0].mxu0 %v848
      %v1091 = vpop.f32.mrb[0].mxu0
      %v1092 = vadd.f32 %v873, %v1091
      %v1093 = vpop.f32.mrb[0].mxu0
      %1094 = vmatprep.mubr.f32.mxu0 0.0
      %1095 = vmatmul.mubr.f32.gmra.mrb[0].mxu0 %v849
      %v1096 = vpop.f32.mrb[0].mxu0
      %v1097 = vadd.f32 %v873, %v1096
      %v1098 = vpop.f32.mrb[0].mxu0
      %1099 = vdwg.mxu0
      %v1100 = vtanh.pop %v942
      %v1101 = vtanh.pop %v947
      %v1102 = vtanh.pop %v952
      %v1103 = vtanh.pop %v957
      %v1104 = vtanh.pop %v962
      %v1105 = vtanh.pop %v967
      %v1106 = vtanh.pop %v972
      %v1107 = vtanh.pop %v977
      %v1108 = vtanh.pop %v982
      %v1109 = vtanh.pop %v987
      %v1110 = vtanh.pop %v992
      %v1111 = vtanh.pop %v997
      %v1112 = vtanh.pop %v1002
      %v1113 = vtanh.pop %v1007
      %v1114 = vtanh.pop %v1012
      %v1115 = vtanh.pop %v1017
      %v1116 = vtanh.pop %v1022
      %v1117 = vtanh.pop %v1027
      %v1118 = vtanh.pop %v1032
      %v1119 = vtanh.pop %v1037
      %v1120 = vtanh.pop %v1042
      %v1121 = vtanh.pop %v1047
      %v1122 = vtanh.pop %v1052
      %v1123 = vtanh.pop %v1057
      %v1124 = vtanh.pop %v1062
      %v1125 = vtanh.pop %v1067
      %v1126 = vtanh.pop %v1072
      %v1127 = vtanh.pop %v1077
      %v1128 = vtanh.pop %v1082
      %v1129 = vtanh.pop %v1087
      %v1130 = vtanh.pop %v1092
      %v1131 = vtanh.pop %v1097
      %s1132 = scalar_lea.vmem %s1, 384
      %v1133 = vld [vmem:[%s1132] sm:$0xff]
      %v1134 = vld [vmem:[%s1132 + $0x8] sm:$0xff]
      %v1135 = vld [vmem:[%s1132 + $0x10] sm:$0xff]
      %v1136 = vld [vmem:[%s1132 + $0x18] sm:$0xff]
      %v1137 = vld [vmem:[%s1132 + $0x20] sm:$0xff]
      %v1138 = vld [vmem:[%s1132 + $0x28] sm:$0xff]
      %v1139 = vld [vmem:[%s1132 + $0x30] sm:$0xff]
      %v1140 = vld [vmem:[%s1132 + $0x38] sm:$0xff]
      %v1141 = vld [vmem:[%s1132 + $0x40] sm:$0xff]
      %v1142 = vld [vmem:[%s1132 + $0x48] sm:$0xff]
      %v1143 = vld [vmem:[%s1132 + $0x50] sm:$0xff]
      %v1144 = vld [vmem:[%s1132 + $0x58] sm:$0xff]
      %v1145 = vld [vmem:[%s1132 + $0x60] sm:$0xff]
      %v1146 = vld [vmem:[%s1132 + $0x68] sm:$0xff]
      %v1147 = vld [vmem:[%s1132 + $0x70] sm:$0xff]
      %v1148 = vld [vmem:[%s1132 + $0x78] sm:$0xff]
      %s1149 = scalar_lea.vmem %s2, 3
      %v1150 = vld [vmem:[%s1149] sm:$0x1]
      %v1152 = vlaneseq
      %v1153 = vshrl.u32 %v1152, 7
      %v1154 = vsub.s32 0, %v1153
      %v1155 = vrot.slane %v1150, %v1154
      %1157 = vmatprep.subr.mxu0 0.0
      %1158 = vmatpush1.msra.mxu0 %v1133
      %1159 = vmatprep.subr.mxu0 0.0
      %1160 = vmatpush1.msra.mxu0 %v1134
      %1161 = vmatprep.subr.mxu0 0.0
      %1162 = vmatpush1.msra.mxu0 %v1135
      %1163 = vmatprep.subr.mxu0 0.0
      %1164 = vmatpush1.msra.mxu0 %v1136
      %1165 = vmatprep.subr.mxu0 0.0
      %1166 = vmatpush1.msra.mxu0 %v1137
      %1167 = vmatprep.subr.mxu0 0.0
      %1168 = vmatpush1.msra.mxu0 %v1138
      %1169 = vmatprep.subr.mxu0 0.0
      %1170 = vmatpush1.msra.mxu0 %v1139
      %1171 = vmatprep.subr.mxu0 0.0
      %1172 = vmatpush1.msra.mxu0 %v1140
      %1173 = vmatprep.subr.mxu0 0.0
      %1174 = vmatpush1.msra.mxu0 %v1141
      %1175 = vmatprep.subr.mxu0 0.0
      %1176 = vmatpush1.msra.mxu0 %v1142
      %1177 = vmatprep.subr.mxu0 0.0
      %1178 = vmatpush1.msra.mxu0 %v1143
      %1179 = vmatprep.subr.mxu0 0.0
      %1180 = vmatpush1.msra.mxu0 %v1144
      %1181 = vmatprep.subr.mxu0 0.0
      %1182 = vmatpush1.msra.mxu0 %v1145
      %1183 = vmatprep.subr.mxu0 0.0
      %1184 = vmatpush1.msra.mxu0 %v1146
      %1185 = vmatprep.subr.mxu0 0.0
      %1186 = vmatpush1.msra.mxu0 %v1147
      %1187 = vmatprep.subr.mxu0 0.0
      %1188 = vmatpush1.msra.mxu0 %v1148
      %1189 = vmatprep.subr.mxu0 0.0
      %1190 = vmatpush1.msra.mxu0 0.0
      %1191 = vmatprep.subr.mxu0 0.0
      %1192 = vmatpush1.msra.mxu0 0.0
      %1193 = vmatprep.subr.mxu0 0.0
      %1194 = vmatpush1.msra.mxu0 0.0
      %1195 = vmatprep.subr.mxu0 0.0
      %1196 = vmatpush1.msra.mxu0 0.0
      %1197 = vmatprep.subr.mxu0 0.0
      %1198 = vmatpush1.msra.mxu0 0.0
      %1199 = vmatprep.subr.mxu0 0.0
      %1200 = vmatpush1.msra.mxu0 0.0
      %1201 = vmatprep.subr.mxu0 0.0
      %1202 = vmatpush1.msra.mxu0 0.0
      %1203 = vmatprep.subr.mxu0 0.0
      %1204 = vmatpush1.msra.mxu0 0.0
      %1205 = vmatprep.subr.mxu0 0.0
      %1206 = vmatpush1.msra.mxu0 0.0
      %1207 = vmatprep.subr.mxu0 0.0
      %1208 = vmatpush1.msra.mxu0 0.0
      %1209 = vmatprep.subr.mxu0 0.0
      %1210 = vmatpush1.msra.mxu0 0.0
      %1211 = vmatprep.subr.mxu0 0.0
      %1212 = vmatpush1.msra.mxu0 0.0
      %1213 = vmatprep.subr.mxu0 0.0
      %1214 = vmatpush1.msra.mxu0 0.0
      %1215 = vmatprep.subr.mxu0 0.0
      %1216 = vmatpush1.msra.mxu0 0.0
      %1217 = vmatprep.subr.mxu0 0.0
      %1218 = vmatpush1.msra.mxu0 0.0
      %1219 = vmatprep.subr.mxu0 0.0
      %1220 = vmatpush1.msra.mxu0 0.0
      %1221 = vmatprep.mubr.f32.mxu0 0.0
      %1222 = vmatmul.mubr.f32.gmra.mrb[0].mxu0 %v1100
      %v1223 = vpop.f32.mrb[0].mxu0
      %v1224 = vadd.f32 %v1155, %v1223
      %v1225 = vpop.f32.mrb[0].mxu0
      %1226 = vmatprep.mubr.f32.mxu0 0.0
      %1227 = vmatmul.mubr.f32.gmra.mrb[0].mxu0 %v1101
      %v1228 = vpop.f32.mrb[0].mxu0
      %v1229 = vadd.f32 %v1155, %v1228
      %v1230 = vpop.f32.mrb[0].mxu0
      %1231 = vmatprep.mubr.f32.mxu0 0.0
      %1232 = vmatmul.mubr.f32.gmra.mrb[0].mxu0 %v1102
      %v1233 = vpop.f32.mrb[0].mxu0
      %v1234 = vadd.f32 %v1155, %v1233
      %v1235 = vpop.f32.mrb[0].mxu0
      %1236 = vmatprep.mubr.f32.mxu0 0.0
      %1237 = vmatmul.mubr.f32.gmra.mrb[0].mxu0 %v1103
      %v1238 = vpop.f32.mrb[0].mxu0
      %v1239 = vadd.f32 %v1155, %v1238
      %v1240 = vpop.f32.mrb[0].mxu0
      %1241 = vmatprep.mubr.f32.mxu0 0.0
      %1242 = vmatmul.mubr.f32.gmra.mrb[0].mxu0 %v1104
      %v1243 = vpop.f32.mrb[0].mxu0
      %v1244 = vadd.f32 %v1155, %v1243
      %v1245 = vpop.f32.mrb[0].mxu0
      %1246 = vmatprep.mubr.f32.mxu0 0.0
      %1247 = vmatmul.mubr.f32.gmra.mrb[0].mxu0 %v1105
      %v1248 = vpop.f32.mrb[0].mxu0
      %v1249 = vadd.f32 %v1155, %v1248
      %v1250 = vpop.f32.mrb[0].mxu0
      %1251 = vmatprep.mubr.f32.mxu0 0.0
      %1252 = vmatmul.mubr.f32.gmra.mrb[0].mxu0 %v1106
      %v1253 = vpop.f32.mrb[0].mxu0
      %v1254 = vadd.f32 %v1155, %v1253
      %v1255 = vpop.f32.mrb[0].mxu0
      %1256 = vmatprep.mubr.f32.mxu0 0.0
      %1257 = vmatmul.mubr.f32.gmra.mrb[0].mxu0 %v1107
      %v1258 = vpop.f32.mrb[0].mxu0
      %v1259 = vadd.f32 %v1155, %v1258
      %v1260 = vpop.f32.mrb[0].mxu0
      %1261 = vmatprep.mubr.f32.mxu0 0.0
      %1262 = vmatmul.mubr.f32.gmra.mrb[0].mxu0 %v1108
      %v1263 = vpop.f32.mrb[0].mxu0
      %v1264 = vadd.f32 %v1155, %v1263
      %v1265 = vpop.f32.mrb[0].mxu0
      %1266 = vmatprep.mubr.f32.mxu0 0.0
      %1267 = vmatmul.mubr.f32.gmra.mrb[0].mxu0 %v1109
      %v1268 = vpop.f32.mrb[0].mxu0
      %v1269 = vadd.f32 %v1155, %v1268
      %v1270 = vpop.f32.mrb[0].mxu0
      %1271 = vmatprep.mubr.f32.mxu0 0.0
      %1272 = vmatmul.mubr.f32.gmra.mrb[0].mxu0 %v1110
      %v1273 = vpop.f32.mrb[0].mxu0
      %v1274 = vadd.f32 %v1155, %v1273
      %v1275 = vpop.f32.mrb[0].mxu0
      %1276 = vmatprep.mubr.f32.mxu0 0.0
      %1277 = vmatmul.mubr.f32.gmra.mrb[0].mxu0 %v1111
      %v1278 = vpop.f32.mrb[0].mxu0
      %v1279 = vadd.f32 %v1155, %v1278
      %v1280 = vpop.f32.mrb[0].mxu0
      %1281 = vmatprep.mubr.f32.mxu0 0.0
      %1282 = vmatmul.mubr.f32.gmra.mrb[0].mxu0 %v1112
      %v1283 = vpop.f32.mrb[0].mxu0
      %v1284 = vadd.f32 %v1155, %v1283
      %v1285 = vpop.f32.mrb[0].mxu0
      %1286 = vmatprep.mubr.f32.mxu0 0.0
      %1287 = vmatmul.mubr.f32.gmra.mrb[0].mxu0 %v1113
      %v1288 = vpop.f32.mrb[0].mxu0
      %v1289 = vadd.f32 %v1155, %v1288
      %v1290 = vpop.f32.mrb[0].mxu0
      %1291 = vmatprep.mubr.f32.mxu0 0.0
      %1292 = vmatmul.mubr.f32.gmra.mrb[0].mxu0 %v1114
      %v1293 = vpop.f32.mrb[0].mxu0
      %v1294 = vadd.f32 %v1155, %v1293
      %v1295 = vpop.f32.mrb[0].mxu0
      %1296 = vmatprep.mubr.f32.mxu0 0.0
      %1297 = vmatmul.mubr.f32.gmra.mrb[0].mxu0 %v1115
      %v1298 = vpop.f32.mrb[0].mxu0
      %v1299 = vadd.f32 %v1155, %v1298
      %v1300 = vpop.f32.mrb[0].mxu0
      %1301 = vmatprep.mubr.f32.mxu0 0.0
      %1302 = vmatmul.mubr.f32.gmra.mrb[0].mxu0 %v1116
      %v1303 = vpop.f32.mrb[0].mxu0
      %v1304 = vadd.f32 %v1155, %v1303
      %v1305 = vpop.f32.mrb[0].mxu0
      %1306 = vmatprep.mubr.f32.mxu0 0.0
      %1307 = vmatmul.mubr.f32.gmra.mrb[0].mxu0 %v1117
      %v1308 = vpop.f32.mrb[0].mxu0
      %v1309 = vadd.f32 %v1155, %v1308
      %v1310 = vpop.f32.mrb[0].mxu0
      %1311 = vmatprep.mubr.f32.mxu0 0.0
      %1312 = vmatmul.mubr.f32.gmra.mrb[0].mxu0 %v1118
      %v1313 = vpop.f32.mrb[0].mxu0
      %v1314 = vadd.f32 %v1155, %v1313
      %v1315 = vpop.f32.mrb[0].mxu0
      %1316 = vmatprep.mubr.f32.mxu0 0.0
      %1317 = vmatmul.mubr.f32.gmra.mrb[0].mxu0 %v1119
      %v1318 = vpop.f32.mrb[0].mxu0
      %v1319 = vadd.f32 %v1155, %v1318
      %v1320 = vpop.f32.mrb[0].mxu0
      %1321 = vmatprep.mubr.f32.mxu0 0.0
      %1322 = vmatmul.mubr.f32.gmra.mrb[0].mxu0 %v1120
      %v1323 = vpop.f32.mrb[0].mxu0
      %v1324 = vadd.f32 %v1155, %v1323
      %v1325 = vpop.f32.mrb[0].mxu0
      %1326 = vmatprep.mubr.f32.mxu0 0.0
      %1327 = vmatmul.mubr.f32.gmra.mrb[0].mxu0 %v1121
      %v1328 = vpop.f32.mrb[0].mxu0
      %v1329 = vadd.f32 %v1155, %v1328
      %v1330 = vpop.f32.mrb[0].mxu0
      %1331 = vmatprep.mubr.f32.mxu0 0.0
      %1332 = vmatmul.mubr.f32.gmra.mrb[0].mxu0 %v1122
      %v1333 = vpop.f32.mrb[0].mxu0
      %v1334 = vadd.f32 %v1155, %v1333
      %v1335 = vpop.f32.mrb[0].mxu0
      %1336 = vmatprep.mubr.f32.mxu0 0.0
      %1337 = vmatmul.mubr.f32.gmra.mrb[0].mxu0 %v1123
      %v1338 = vpop.f32.mrb[0].mxu0
      %v1339 = vadd.f32 %v1155, %v1338
      %v1340 = vpop.f32.mrb[0].mxu0
      %1341 = vmatprep.mubr.f32.mxu0 0.0
      %1342 = vmatmul.mubr.f32.gmra.mrb[0].mxu0 %v1124
      %v1343 = vpop.f32.mrb[0].mxu0
      %v1344 = vadd.f32 %v1155, %v1343
      %v1345 = vpop.f32.mrb[0].mxu0
      %1346 = vmatprep.mubr.f32.mxu0 0.0
      %1347 = vmatmul.mubr.f32.gmra.mrb[0].mxu0 %v1125
      %v1348 = vpop.f32.mrb[0].mxu0
      %v1349 = vadd.f32 %v1155, %v1348
      %v1350 = vpop.f32.mrb[0].mxu0
      %1351 = vmatprep.mubr.f32.mxu0 0.0
      %1352 = vmatmul.mubr.f32.gmra.mrb[0].mxu0 %v1126
      %v1353 = vpop.f32.mrb[0].mxu0
      %v1354 = vadd.f32 %v1155, %v1353
      %v1355 = vpop.f32.mrb[0].mxu0
      %1356 = vmatprep.mubr.f32.mxu0 0.0
      %1357 = vmatmul.mubr.f32.gmra.mrb[0].mxu0 %v1127
      %v1358 = vpop.f32.mrb[0].mxu0
      %v1359 = vadd.f32 %v1155, %v1358
      %v1360 = vpop.f32.mrb[0].mxu0
      %1361 = vmatprep.mubr.f32.mxu0 0.0
      %1362 = vmatmul.mubr.f32.gmra.mrb[0].mxu0 %v1128
      %v1363 = vpop.f32.mrb[0].mxu0
      %v1364 = vadd.f32 %v1155, %v1363
      %v1365 = vpop.f32.mrb[0].mxu0
      %1366 = vmatprep.mubr.f32.mxu0 0.0
      %1367 = vmatmul.mubr.f32.gmra.mrb[0].mxu0 %v1129
      %v1368 = vpop.f32.mrb[0].mxu0
      %v1369 = vadd.f32 %v1155, %v1368
      %v1370 = vpop.f32.mrb[0].mxu0
      %1371 = vmatprep.mubr.f32.mxu0 0.0
      %1372 = vmatmul.mubr.f32.gmra.mrb[0].mxu0 %v1130
      %v1373 = vpop.f32.mrb[0].mxu0
      %v1374 = vadd.f32 %v1155, %v1373
      %v1375 = vpop.f32.mrb[0].mxu0
      %1376 = vmatprep.mubr.f32.mxu0 0.0
      %1377 = vmatmul.mubr.f32.gmra.mrb[0].mxu0 %v1131
      %v1378 = vpop.f32.mrb[0].mxu0
      %v1379 = vadd.f32 %v1155, %v1378
      %v1380 = vpop.f32.mrb[0].mxu0
      %1381 = vdwg.mxu0
      %1382 = vst [vmem:[%s172] sm:$0xff] %v1224
      %1383 = vst [vmem:[%s172 + $0x8] sm:$0xff] %v1229
      %1384 = vst [vmem:[%s172 + $0x10] sm:$0xff] %v1234
      %1385 = vst [vmem:[%s172 + $0x18] sm:$0xff] %v1239
      %1386 = vst [vmem:[%s172 + $0x20] sm:$0xff] %v1244
      %1387 = vst [vmem:[%s172 + $0x28] sm:$0xff] %v1249
      %1388 = vst [vmem:[%s172 + $0x30] sm:$0xff] %v1254
      %1389 = vst [vmem:[%s172 + $0x38] sm:$0xff] %v1259
      %1390 = vst [vmem:[%s172 + $0x40] sm:$0xff] %v1264
      %1391 = vst [vmem:[%s172 + $0x48] sm:$0xff] %v1269
      %1392 = vst [vmem:[%s172 + $0x50] sm:$0xff] %v1274
      %1393 = vst [vmem:[%s172 + $0x58] sm:$0xff] %v1279
      %1394 = vst [vmem:[%s172 + $0x60] sm:$0xff] %v1284
      %1395 = vst [vmem:[%s172 + $0x68] sm:$0xff] %v1289
      %1396 = vst [vmem:[%s172 + $0x70] sm:$0xff] %v1294
      %1397 = vst [vmem:[%s172 + $0x78] sm:$0xff] %v1299
      %1398 = vst [vmem:[%s172 + $0x80] sm:$0xff] %v1304
      %1399 = vst [vmem:[%s172 + $0x88] sm:$0xff] %v1309
      %1400 = vst [vmem:[%s172 + $0x90] sm:$0xff] %v1314
      %1401 = vst [vmem:[%s172 + $0x98] sm:$0xff] %v1319
      %1402 = vst [vmem:[%s172 + $0xa0] sm:$0xff] %v1324
      %1403 = vst [vmem:[%s172 + $0xa8] sm:$0xff] %v1329
      %1404 = vst [vmem:[%s172 + $0xb0] sm:$0xff] %v1334
      %1405 = vst [vmem:[%s172 + $0xb8] sm:$0xff] %v1339
      %1406 = vst [vmem:[%s172 + $0xc0] sm:$0xff] %v1344
      %1407 = vst [vmem:[%s172 + $0xc8] sm:$0xff] %v1349
      %1408 = vst [vmem:[%s172 + $0xd0] sm:$0xff] %v1354
      %1409 = vst [vmem:[%s172 + $0xd8] sm:$0xff] %v1359
      %1410 = vst [vmem:[%s172 + $0xe0] sm:$0xff] %v1364
      %1411 = vst [vmem:[%s172 + $0xe8] sm:$0xff] %v1369
      %1412 = vst [vmem:[%s172 + $0xf0] sm:$0xff] %v1374
      %1413 = vst [vmem:[%s172 + $0xf8] sm:$0xff] %v1379
      %s1414 = smul.u32 32, %s14
      %p1415 = scmp.lt.s32.totalorder %s1414, 63
      %s1416 = scalar_select %p1415, %s1414, 63
      %s1417 = smul.addr %s1416, 8
      %s1418 = scalar_lea.vmem %s3, %s1417
      // Predicated region
      $region33: #{_forward_jit.1} parent=31 // pred_check
        %p1419 = pneg %p100
      $region34: #{_forward_jit.1} parent=31 // pred_check_branch
        %1421 = sbr.rel (%p1419) target = $region36
      $region35: #{_forward_jit.1} parent=31 // pred_region
        %s1422 = smul.u32 32, %s14
      $region36: #{_forward_jit.1} parent=31 // pred_fallthru
        _
    $region32: #{_forward_jit.1} parent=5 // pred_fallthru
      _
    %p1423 = scmp.le.s32.totalorder 2, %s9
    // Predicated region
    $region37: #{_forward_jit.1} parent=5 // pred_check
      %p1424 = pneg %p1423
    $region38: #{_forward_jit.1} parent=5 // pred_check_branch
      %1426 = sbr.rel (%p1424) target = $region40
    $region39: #{_forward_jit.1} parent=5 // pred_region
      %s1427 = ssub.s32 %s9, 2
      // Predicated region
      $region41: #{_forward_jit.1} parent=39 // pred_check
        %p1428 = pneg %p106
      $region42: #{_forward_jit.1} parent=39 // pred_check_branch
        %1430 = sbr.rel (%p1428) target = $region44
      $region43: #{_forward_jit.1} parent=39 // pred_region
        %s1431 = smul.u32 32, %s15
        %p1432 = scmp.lt.s32.totalorder %s1431, 63
        %s1433 = scalar_select %p1432, %s1431, 63
        %s1434 = smul.addr %s1433, 8
        %s1435 = scalar_lea.vmem %s3, %s1434
      $region44: #{_forward_jit.1} parent=39 // pred_fallthru
        _
    $region40: #{_forward_jit.1} parent=5 // pred_fallthru
      _
  $region6: #{_forward_jit.1} parent=0 // loop_footer
    %s13 = sadd.s32 1, %s9
  $region7: #{_forward_jit.1} parent=0 // loop_footer_branch
    %8 = sbr.rel target = $region3
  $region8: #{_forward_jit.1} parent=0 // loop_exit
    _

</llo_original>
